<compile_context>
chip_gen: v7x
topology: tpu7x:2x2x1
jax: 0.10.0
libtpu: 0.0.40
codegen_flags: <defaults>
</compile_context>

<pallas_src>
import functools

import jax
import jax.numpy as jnp
from jax import lax
from jax.experimental import pallas as pl
from jax.experimental.pallas import tpu as pltpu


def conv_block_kernel(x_ref, w1_ref, w2_ref, mask_ref, o_ref, *,
                      IC, OC, H, W, K, P, is_norm, eps, negative_slope):
    """One batch element of ConvBlock.

    x_ref    : (IC, H*W)        VMEM  (lane-dense flattened input)
    w1_ref   : (OC, K*K*IC)     VMEM  (conv1 weight, tap-major flattening)
    w2_ref   : (OC, OC)         VMEM  (1x1 conv2 weight)
    mask_ref : (K*K, H*W)       VMEM  (per-tap zero-padding validity masks, f32)
    o_ref    : (OC, H*W)        VMEM
    """
    HW = H * W
    x = x_ref[...].astype(jnp.float32)       # (IC, HW)
    masks = mask_ref[...]                    # (K*K, HW)

    # Build all K*K shifted+masked tap views (register resident), then one MXU dot.
    cols = []
    for t in range(K * K):
        dh = t // K - P
        dw = t % K - P
        d = dh * W + dw                      # flat shift: want x[:, p + d]
        if d == 0:
            shifted = x
        else:
            shifted = pltpu.roll(x, shift=(-d) % HW, axis=1)
        # wrapped lanes are always out-of-bounds taps -> zeroed by the mask
        cols.append(shifted * masks[t:t + 1, :])
    xs = jnp.concatenate(cols, axis=0)       # (K*K*IC, HW)

    # conv1 as a single matmul on the MXU.
    y = jnp.dot(w1_ref[...].astype(jnp.float32), xs,
                preferred_element_type=jnp.float32)        # (OC, HW)

    if is_norm:
        # InstanceNorm2d (affine=False, biased variance, eps=1e-5), per channel
        # over the spatial (lane) axis.
        mean = jnp.mean(y, axis=1, keepdims=True)
        var = jnp.mean(jnp.square(y - mean), axis=1, keepdims=True)
        y = (y - mean) * lax.rsqrt(var + eps)

    # LeakyReLU(0.1)
    y = jnp.where(y >= 0, y, negative_slope * y)

    # conv2: 1x1 convolution == channel-mixing matmul on the MXU.
    out = jnp.dot(w2_ref[...].astype(jnp.float32), y,
                  preferred_element_type=jnp.float32)       # (OC, HW)
    o_ref[...] = out.astype(o_ref.dtype)


def conv_block_pallas(x, w1, w2, *, stride=1, padding=1, is_norm=True,
                      eps=1e-5, negative_slope=0.1):
    """x: (N, IC, H, W); w1: (OC, IC, K, K); w2: (OC, OC, 1, 1)."""
    N, IC, H, W = x.shape
    OC, IC_w, K, K2 = w1.shape
    assert IC_w == IC and K2 == K
    assert w2.shape == (OC, OC, 1, 1)
    # TODO(synk): general stride / non-'same' padding (output size != input size)
    # is not implemented in the flat-shift kernel; only stride=1, 2*padding==K-1.
    assert stride == 1 and 2 * padding == K - 1
    P = padding
    HW = H * W

    # Layout plumbing in the wrapper (lane-dense views, weight flattening).
    x_flat = x.reshape(N, IC, HW)
    w1_flat = jnp.transpose(w1, (0, 2, 3, 1)).reshape(OC, K * K * IC)
    w2_flat = w2.reshape(OC, OC)

    # Precomputed per-tap zero-padding validity masks (static data), (K*K, HW).
    h_idx = jnp.arange(H)[:, None]
    w_idx = jnp.arange(W)[None, :]
    mask_rows = []
    for t in range(K * K):
        dh = t // K - P
        dw = t % K - P
        valid = ((h_idx + dh >= 0) & (h_idx + dh < H)
                 & (w_idx + dw >= 0) & (w_idx + dw < W))
        mask_rows.append(valid.reshape(HW))
    mask = jnp.stack(mask_rows).astype(jnp.float32)

    kernel = functools.partial(
        conv_block_kernel, IC=IC, OC=OC, H=H, W=W, K=K, P=P,
        is_norm=is_norm, eps=eps, negative_slope=negative_slope)

    out_flat = pl.pallas_call(
        kernel,
        out_shape=jax.ShapeDtypeStruct((N, OC, HW), x.dtype),
        grid=(N,),
        in_specs=[
            pl.BlockSpec((None, IC, HW), lambda n: (n, 0, 0)),
            pl.BlockSpec((OC, K * K * IC), lambda n: (0, 0)),
            pl.BlockSpec((OC, OC), lambda n: (0, 0)),
            pl.BlockSpec((K * K, HW), lambda n: (0, 0)),
        ],
        out_specs=pl.BlockSpec((None, OC, HW), lambda n: (n, 0, 0)),
        compiler_params=pltpu.CompilerParams(dimension_semantics=("parallel",)),
    )(x_flat, w1_flat, w2_flat, mask)

    return out_flat.reshape(N, OC, H, W)


def conv_block_reference(x, w1, w2, *, stride=1, padding=1, is_norm=True,
                         eps=1e-5, negative_slope=0.1):
    """Pure-JAX reference matching the PyTorch ConvBlock forward."""
    out = lax.conv_general_dilated(
        x, w1, window_strides=(stride, stride),
        padding=[(padding, padding), (padding, padding)],
        dimension_numbers=("NCHW", "OIHW", "NCHW"))
    if is_norm:
        mean = out.mean(axis=(2, 3), keepdims=True)
        var = ((out - mean) ** 2).mean(axis=(2, 3), keepdims=True)
        out = (out - mean) / jnp.sqrt(var + eps)
    out = jnp.where(out >= 0, out, negative_slope * out)
    out = lax.conv_general_dilated(
        out, w2, window_strides=(1, 1), padding=[(0, 0), (0, 0)],
        dimension_numbers=("NCHW", "OIHW", "NCHW"))
    return out


if __name__ == "__main__":
    N, IC, OC, H, W = 2, 4, 8, 16, 16
    K, stride, padding = 3, 1, 1

    key = jax.random.PRNGKey(0)
    kx, k1, k2 = jax.random.split(key, 3)

    x = jax.random.normal(kx, (N, IC, H, W), jnp.float32)
    w1 = jax.random.normal(k1, (OC, IC, K, K), jnp.float32) * (1.0 / (IC * K * K) ** 0.5)
    w2 = jax.random.normal(k2, (OC, OC, 1, 1), jnp.float32) * (1.0 / OC ** 0.5)

    out = conv_block_pallas(x, w1, w2, stride=stride, padding=padding, is_norm=True)
    out = jax.block_until_ready(out)

    ref = conv_block_reference(x, w1, w2, stride=stride, padding=padding, is_norm=True)
    assert out.shape == ref.shape == (N, OC, H, W)
    max_err = float(jnp.max(jnp.abs(out - ref)))
    assert jnp.allclose(out, ref, atol=1e-2, rtol=1e-2), max_err

    print("KERNEL_OK")
</pallas_src>

<mosaic_0001>
module attributes {stable_mosaic.version = 11 : i64} {
  func.func @conv_block_kernel(%arg0: i32, %arg1: memref<1x4x256xf32, #tpu.memory_space<vmem>>, %arg2: memref<8x36xf32, #tpu.memory_space<vmem>>, %arg3: memref<8x8xf32, #tpu.memory_space<vmem>>, %arg4: memref<9x256xf32, #tpu.memory_space<vmem>>, %arg5: memref<1x8x256xf32, #tpu.memory_space<vmem>>) attributes {dimension_semantics = [#tpu.dimension_semantics<parallel>], iteration_bounds = array<i64: 2>, scalar_prefetch = 0 : i64, scratch_operands = 0 : i64, tpu.core_type = #tpu.core_type<tc>, window_params = [{transform_indices = @transform_0, window_bounds = array<i64: 1, 4, 256>}, {pipeline_mode = #tpu.pipeline_mode<synchronous>, transform_indices = @transform_1, window_bounds = array<i64: 8, 36>}, {pipeline_mode = #tpu.pipeline_mode<synchronous>, transform_indices = @transform_2, window_bounds = array<i64: 8, 8>}, {pipeline_mode = #tpu.pipeline_mode<synchronous>, transform_indices = @transform_3, window_bounds = array<i64: 9, 256>}, {transform_indices = @transform_4, window_bounds = array<i64: 1, 8, 256>}]} {
    %c0 = arith.constant 0 : index
    %c0_0 = arith.constant 0 : index
    %c0_1 = arith.constant 0 : index
    %0 = vector.load %arg1[%c0, %c0_0, %c0_1] : memref<1x4x256xf32, #tpu.memory_space<vmem>>, vector<1x4x256xf32>
    %1 = vector.shape_cast %0 : vector<1x4x256xf32> to vector<4x256xf32>
    %c0_2 = arith.constant 0 : index
    %c0_3 = arith.constant 0 : index
    %2 = vector.load %arg4[%c0_2, %c0_3] : memref<9x256xf32, #tpu.memory_space<vmem>>, vector<9x256xf32>
    %c17_i32 = arith.constant 17 : i32
    %3 = tpu.dynamic_rotate %1 by %c17_i32 dim 1 : vector<4x256xf32>, i32 -> vector<4x256xf32>
    %4 = vector.extract_strided_slice %2 {offsets = [0, 0], sizes = [1, 256], strides = [1, 1]} : vector<9x256xf32> to vector<1x256xf32>
    %5 = vector.broadcast %4 : vector<1x256xf32> to vector<4x256xf32>
    %6 = arith.mulf %3, %5 : vector<4x256xf32>
    %c16_i32 = arith.constant 16 : i32
    %7 = tpu.dynamic_rotate %1 by %c16_i32 dim 1 : vector<4x256xf32>, i32 -> vector<4x256xf32>
    %8 = vector.extract_strided_slice %2 {offsets = [1, 0], sizes = [1, 256], strides = [1, 1]} : vector<9x256xf32> to vector<1x256xf32>
    %9 = vector.broadcast %8 : vector<1x256xf32> to vector<4x256xf32>
    %10 = arith.mulf %7, %9 : vector<4x256xf32>
    %c15_i32 = arith.constant 15 : i32
    %11 = tpu.dynamic_rotate %1 by %c15_i32 dim 1 : vector<4x256xf32>, i32 -> vector<4x256xf32>
    %12 = vector.extract_strided_slice %2 {offsets = [2, 0], sizes = [1, 256], strides = [1, 1]} : vector<9x256xf32> to vector<1x256xf32>
    %13 = vector.broadcast %12 : vector<1x256xf32> to vector<4x256xf32>
    %14 = arith.mulf %11, %13 : vector<4x256xf32>
    %c1_i32 = arith.constant 1 : i32
    %15 = tpu.dynamic_rotate %1 by %c1_i32 dim 1 : vector<4x256xf32>, i32 -> vector<4x256xf32>
    %16 = vector.extract_strided_slice %2 {offsets = [3, 0], sizes = [1, 256], strides = [1, 1]} : vector<9x256xf32> to vector<1x256xf32>
    %17 = vector.broadcast %16 : vector<1x256xf32> to vector<4x256xf32>
    %18 = arith.mulf %15, %17 : vector<4x256xf32>
    %19 = vector.extract_strided_slice %2 {offsets = [4, 0], sizes = [1, 256], strides = [1, 1]} : vector<9x256xf32> to vector<1x256xf32>
    %20 = vector.broadcast %19 : vector<1x256xf32> to vector<4x256xf32>
    %21 = arith.mulf %1, %20 : vector<4x256xf32>
    %c255_i32 = arith.constant 255 : i32
    %22 = tpu.dynamic_rotate %1 by %c255_i32 dim 1 : vector<4x256xf32>, i32 -> vector<4x256xf32>
    %23 = vector.extract_strided_slice %2 {offsets = [5, 0], sizes = [1, 256], strides = [1, 1]} : vector<9x256xf32> to vector<1x256xf32>
    %24 = vector.broadcast %23 : vector<1x256xf32> to vector<4x256xf32>
    %25 = arith.mulf %22, %24 : vector<4x256xf32>
    %c241_i32 = arith.constant 241 : i32
    %26 = tpu.dynamic_rotate %1 by %c241_i32 dim 1 : vector<4x256xf32>, i32 -> vector<4x256xf32>
    %27 = vector.extract_strided_slice %2 {offsets = [6, 0], sizes = [1, 256], strides = [1, 1]} : vector<9x256xf32> to vector<1x256xf32>
    %28 = vector.broadcast %27 : vector<1x256xf32> to vector<4x256xf32>
    %29 = arith.mulf %26, %28 : vector<4x256xf32>
    %c240_i32 = arith.constant 240 : i32
    %30 = tpu.dynamic_rotate %1 by %c240_i32 dim 1 : vector<4x256xf32>, i32 -> vector<4x256xf32>
    %31 = vector.extract_strided_slice %2 {offsets = [7, 0], sizes = [1, 256], strides = [1, 1]} : vector<9x256xf32> to vector<1x256xf32>
    %32 = vector.broadcast %31 : vector<1x256xf32> to vector<4x256xf32>
    %33 = arith.mulf %30, %32 : vector<4x256xf32>
    %c239_i32 = arith.constant 239 : i32
    %34 = tpu.dynamic_rotate %1 by %c239_i32 dim 1 : vector<4x256xf32>, i32 -> vector<4x256xf32>
    %35 = vector.extract_strided_slice %2 {offsets = [8, 0], sizes = [1, 256], strides = [1, 1]} : vector<9x256xf32> to vector<1x256xf32>
    %36 = vector.broadcast %35 : vector<1x256xf32> to vector<4x256xf32>
    %37 = arith.mulf %34, %36 : vector<4x256xf32>
    %38 = tpu.concatenate %6, %10, %14, %18, %21, %25, %29, %33, %37 in 0 : vector<4x256xf32>, vector<4x256xf32>, vector<4x256xf32>, vector<4x256xf32>, vector<4x256xf32>, vector<4x256xf32>, vector<4x256xf32>, vector<4x256xf32>, vector<4x256xf32> -> vector<36x256xf32>
    %c0_4 = arith.constant 0 : index
    %c0_5 = arith.constant 0 : index
    %39 = vector.load %arg2[%c0_4, %c0_5] : memref<8x36xf32, #tpu.memory_space<vmem>>, vector<8x36xf32>
    %cst = arith.constant dense<0.000000e+00> : vector<8x256xf32>
    %40 = tpu.matmul %39, %38, %cst {dimension_numbers = #tpu.dot_dimension_numbers<[1], [0], [0], [1], [0, 0, 1, 1], [], []>} : vector<8x36xf32>, vector<36x256xf32>, vector<8x256xf32> -> vector<8x256xf32>
    %cst_6 = arith.constant dense<0.000000e+00> : vector<8xf32>
    %41 = vector.multi_reduction <add>, %40, %cst_6 [1] : vector<8x256xf32> to vector<8xf32>
    %42 = vector.shape_cast %41 : vector<8xf32> to vector<8x1xf32>
    %cst_7 = arith.constant 2.560000e+02 : f32
    %43 = vector.broadcast %cst_7 : f32 to vector<8x1xf32>
    %44 = arith.divf %42, %43 : vector<8x1xf32>
    %45 = vector.broadcast %44 : vector<8x1xf32> to vector<8x256xf32>
    %46 = arith.subf %40, %45 : vector<8x256xf32>
    %47 = arith.mulf %46, %46 : vector<8x256xf32>
    %cst_8 = arith.constant dense<0.000000e+00> : vector<8xf32>
    %48 = vector.multi_reduction <add>, %47, %cst_8 [1] : vector<8x256xf32> to vector<8xf32>
    %49 = vector.shape_cast %48 : vector<8xf32> to vector<8x1xf32>
    %cst_9 = arith.constant 2.560000e+02 : f32
    %50 = vector.broadcast %cst_9 : f32 to vector<8x1xf32>
    %51 = arith.divf %49, %50 : vector<8x1xf32>
    %52 = vector.broadcast %44 : vector<8x1xf32> to vector<8x256xf32>
    %53 = arith.subf %40, %52 : vector<8x256xf32>
    %cst_10 = arith.constant 9.99999974E-6 : f32
    %54 = vector.broadcast %cst_10 : f32 to vector<8x1xf32>
    %55 = arith.addf %51, %54 : vector<8x1xf32>
    %56 = math.rsqrt %55 : vector<8x1xf32>
    %57 = vector.broadcast %56 : vector<8x1xf32> to vector<8x256xf32>
    %58 = arith.mulf %53, %57 : vector<8x256xf32>
    %cst_11 = arith.constant 0.000000e+00 : f32
    %59 = vector.broadcast %cst_11 : f32 to vector<8x256xf32>
    %60 = arith.cmpf oge, %58, %59 : vector<8x256xf32>
    %cst_12 = arith.constant 1.000000e-01 : f32
    %61 = vector.broadcast %cst_12 : f32 to vector<8x256xf32>
    %62 = arith.mulf %61, %58 : vector<8x256xf32>
    %63 = arith.select %60, %58, %62 : vector<8x256xi1>, vector<8x256xf32>
    %c0_13 = arith.constant 0 : index
    %c0_14 = arith.constant 0 : index
    %64 = vector.load %arg3[%c0_13, %c0_14] : memref<8x8xf32, #tpu.memory_space<vmem>>, vector<8x8xf32>
    %cst_15 = arith.constant dense<0.000000e+00> : vector<8x256xf32>
    %65 = tpu.matmul %64, %63, %cst_15 {dimension_numbers = #tpu.dot_dimension_numbers<[1], [0], [0], [1], [0, 0, 1, 1], [], []>} : vector<8x8xf32>, vector<8x256xf32>, vector<8x256xf32> -> vector<8x256xf32>
    %c0_16 = arith.constant 0 : index
    %c0_17 = arith.constant 0 : index
    %c0_18 = arith.constant 0 : index
    %66 = vector.load %arg5[%c0_16, %c0_17, %c0_18] : memref<1x8x256xf32, #tpu.memory_space<vmem>>, vector<1x8x256xf32>
    %67 = vector.shape_cast %66 : vector<1x8x256xf32> to vector<8x256xf32>
    %68 = vector.shape_cast %65 : vector<8x256xf32> to vector<1x8x256xf32>
    tpu.vector_store %arg5[%c0_16, %c0_17, %c0_18], %68 {strides = array<i32>} : memref<1x8x256xf32, #tpu.memory_space<vmem>>, vector<1x8x256xf32>,
    return
  }
  func.func @transform_0(%arg0: i32) -> (i32, i32, i32) {
    %c0_i32 = arith.constant 0 : i32
    %c0_i32_0 = arith.constant 0 : i32
    %c0_i32_1 = arith.constant 0 : i32
    return %arg0, %c0_i32, %c0_i32_0 : i32, i32, i32
  }
  func.func @transform_1(%arg0: i32) -> (i32, i32) {
    %c0_i32 = arith.constant 0 : i32
    %c0_i32_0 = arith.constant 0 : i32
    %c0_i32_1 = arith.constant 0 : i32
    return %c0_i32, %c0_i32_0 : i32, i32
  }
  func.func @transform_2(%arg0: i32) -> (i32, i32) {
    %c0_i32 = arith.constant 0 : i32
    %c0_i32_0 = arith.constant 0 : i32
    %c0_i32_1 = arith.constant 0 : i32
    return %c0_i32, %c0_i32_0 : i32, i32
  }
  func.func @transform_3(%arg0: i32) -> (i32, i32) {
    %c0_i32 = arith.constant 0 : i32
    %c0_i32_0 = arith.constant 0 : i32
    %c0_i32_1 = arith.constant 0 : i32
    return %c0_i32, %c0_i32_0 : i32, i32
  }
  func.func @transform_4(%arg0: i32) -> (i32, i32, i32) {
    %c0_i32 = arith.constant 0 : i32
    %c0_i32_0 = arith.constant 0 : i32
    %c0_i32_1 = arith.constant 0 : i32
    return %arg0, %c0_i32, %c0_i32_0 : i32, i32, i32
  }
}

</mosaic_0001>

<llo_original>
// kernel: tpu_custom_call.1
$region0: #{tpu_custom_call.1}
  #allocation0 [shape = 'u32[]', space=smem, size = 0x4, offset = 0x4, fixed_abs, tag = 'smem constant byte address 0x4 - core index']
  #allocation1 [shape = 'u32[144,128]{1,0:T(1,128)}', space=vmem, size = 0x12000, scoped, tag = 'internal scratch']
  %s0 = inlined_call_operand.hbm [shape: f32[2,4,256], index: 0, kind: input, shape index: {}]
  %s1 = inlined_call_operand.hbm [shape: f32[8,36], index: 1, kind: input, shape index: {}]
  %s2 = inlined_call_operand.hbm [shape: f32[8,8], index: 2, kind: input, shape index: {}]
  %s3 = inlined_call_operand.hbm [shape: f32[9,256], index: 3, kind: input, shape index: {}]
  %s4 = inlined_call_operand.hbm [shape: f32[2,8,256], index: 4, kind: output, shape index: {}]
  %s5 = sld [smem:[#allocation0]]
  $region65: #{tpu_custom_call.1} parent=0
    _
  %s7 = ssub.s32 1, %s5
  %s8 = scalar_select 0, %s7, %s5
  $region1: #{tpu_custom_call.1} parent=0
    #allocation2 [shape = 'u8[8192]{0}', space=vmem, size = 0x2000, scoped, tag = 'input window, operand 0']
    #allocation3 [shape = 's32[2]{0}', space=sflag, size = 0x8, scoped, tag = 'scoped memory for tpu_custom_call.1']
    #allocation4 [shape = 's32[2]{0}', space=sflag, size = 0x8, scoped, tag = 'scoped memory for tpu_custom_call.1']
    #allocation5 [shape = 'u8[4096]{0}', space=vmem, size = 0x1000, scoped, tag = 'input window, operand 1, single buffered']
    #allocation6 [shape = 's32[1]{0}', space=sflag, size = 0x4, scoped, tag = 'scoped memory for tpu_custom_call.1']
    #allocation7 [shape = 'u8[4096]{0}', space=vmem, size = 0x1000, scoped, tag = 'input window, operand 2, single buffered']
    #allocation8 [shape = 'u8[16384]{0}', space=vmem, size = 0x4000, scoped, tag = 'input window, operand 3, single buffered']
    #allocation9 [shape = 's32[1]{0}', space=sflag, size = 0x4, scoped, tag = 'scoped memory for tpu_custom_call.1']
    #allocation10 [shape = 'u8[16384]{0}', space=vmem, size = 0x4000, scoped, tag = 'output window, operand 0']
    %9 = vsyncpa [#allocation3], 0
    %s10 = scalar_lea.sflag [#allocation3], 1
    %11 = vsyncpa %s10, 0
    %12 = vsyncpa [#allocation6], 0
    %13 = vsyncpa [#allocation9], 0
    %14 = vsyncpa [#allocation4], 0
    %s15 = scalar_lea.sflag [#allocation4], 1
    %16 = vsyncpa %s15, 0
    loop: start=0, step=1, limit=4
    $region2: #{tpu_custom_call.1} parent=1 // loop_pre_header
      _
    $region3: #{tpu_custom_call.1} parent=1 // loop_header
      %s18 = sphi 0, %s22
      %p19 = scmp.ge.s32.totalorder %s18, 4
      %s28 = sphi 0, %s30
      %s31 = sphi 0, %s28
      %s32 = sphi 0, %s31
      %s48 = sphi 0, %s32
      %s52 = sphi 0, %s52
      %s54 = sphi 0, %s52
      %s55 = sphi 0, %s54
      %s69 = sphi 0, %s55
      %s73 = sphi 0, %s73
      %s75 = sphi 0, %s73
      %s76 = sphi 0, %s75
      %s90 = sphi 0, %s76
      %s94 = sphi 0, %s94
      %s96 = sphi 0, %s94
      %s97 = sphi 0, %s96
      %s111 = sphi 0, %s97
      %s117 = sphi 0, %s119
      %s120 = sphi 0, %s117
      %s121 = sphi 0, %s120
      %s137 = sphi 0, %s121
    $region4: #{tpu_custom_call.1} parent=1 // loop_header_branch
      %21 = sbr.rel (%p19) target = $region8
    $region5: #{tpu_custom_call.1} parent=1 // loop_body
      %s23 = ssub.s32 %s18, 1
      %s24 = ssub.s32 %s18, 2
      %s25 = sadd.s32 %s18, 1
      %s26 = ssub.s32 %s18, %s25
      %p27 = scmp.eq.s32.totalorder %s26, 0
      %s29 = sadd.s32 %s28, 1
      %s30 = scalar_select %p27, %s28, %s29
      %p33 = pneg %p27
      %p34 = scmp.eq.s32.totalorder %s18, 1
      %p35 = por %p33, %p34
      %p36 = scmp.ne.s32.totalorder %s28, %s31
      %p37 = scmp.eq.s32.totalorder %s18, 0
      %p38 = por %p36, %p37
      %p39 = scmp.ne.s32.totalorder %s28, %s31
      %p40 = scmp.eq.s32.totalorder %s23, 1
      %p41 = por %p39, %p40
      %p42 = scmp.ne.s32.totalorder %s31, %s32
      %p43 = scmp.eq.s32.totalorder %s23, 0
      %p44 = por %p42, %p43
      %p45 = scmp.ne.s32.totalorder %s31, %s32
      %p46 = scmp.eq.s32.totalorder %s24, 1
      %p47 = por %p45, %p46
      %p49 = scmp.ne.s32.totalorder %s32, %s48
      %p50 = scmp.eq.s32.totalorder %s24, 0
      %p51 = por %p49, %p50
      %s53 = sadd.s32 %s52, 1
      %p56 = scmp.eq.s32.totalorder %s18, 1
      %p57 = scmp.ne.s32.totalorder %s52, %s54
      %p58 = scmp.eq.s32.totalorder %s18, 0
      %p59 = por %p57, %p58
      %p60 = scmp.ne.s32.totalorder %s52, %s54
      %p61 = scmp.eq.s32.totalorder %s23, 1
      %p62 = por %p60, %p61
      %p63 = scmp.ne.s32.totalorder %s54, %s55
      %p64 = scmp.eq.s32.totalorder %s23, 0
      %p65 = por %p63, %p64
      %p66 = scmp.ne.s32.totalorder %s54, %s55
      %p67 = scmp.eq.s32.totalorder %s24, 1
      %p68 = por %p66, %p67
      %p70 = scmp.ne.s32.totalorder %s55, %s69
      %p71 = scmp.eq.s32.totalorder %s24, 0
      %p72 = por %p70, %p71
      %s74 = sadd.s32 %s73, 1
      %p77 = scmp.eq.s32.totalorder %s18, 1
      %p78 = scmp.ne.s32.totalorder %s73, %s75
      %p79 = scmp.eq.s32.totalorder %s18, 0
      %p80 = por %p78, %p79
      %p81 = scmp.ne.s32.totalorder %s73, %s75
      %p82 = scmp.eq.s32.totalorder %s23, 1
      %p83 = por %p81, %p82
      %p84 = scmp.ne.s32.totalorder %s75, %s76
      %p85 = scmp.eq.s32.totalorder %s23, 0
      %p86 = por %p84, %p85
      %p87 = scmp.ne.s32.totalorder %s75, %s76
      %p88 = scmp.eq.s32.totalorder %s24, 1
      %p89 = por %p87, %p88
      %p91 = scmp.ne.s32.totalorder %s76, %s90
      %p92 = scmp.eq.s32.totalorder %s24, 0
      %p93 = por %p91, %p92
      %s95 = sadd.s32 %s94, 1
      %p98 = scmp.eq.s32.totalorder %s18, 1
      %p99 = scmp.ne.s32.totalorder %s94, %s96
      %p100 = scmp.eq.s32.totalorder %s18, 0
      %p101 = por %p99, %p100
      %p102 = scmp.ne.s32.totalorder %s94, %s96
      %p103 = scmp.eq.s32.totalorder %s23, 1
      %p104 = por %p102, %p103
      %p105 = scmp.ne.s32.totalorder %s96, %s97
      %p106 = scmp.eq.s32.totalorder %s23, 0
      %p107 = por %p105, %p106
      %p108 = scmp.ne.s32.totalorder %s96, %s97
      %p109 = scmp.eq.s32.totalorder %s24, 1
      %p110 = por %p108, %p109
      %p112 = scmp.ne.s32.totalorder %s97, %s111
      %p113 = scmp.eq.s32.totalorder %s24, 0
      %p114 = por %p112, %p113
      %s115 = ssub.s32 %s18, %s25
      %p116 = scmp.eq.s32.totalorder %s115, 0
      %s118 = sadd.s32 %s117, 1
      %s119 = scalar_select %p116, %s117, %s118
      %p122 = pneg %p116
      %p123 = scmp.eq.s32.totalorder %s18, 1
      %p124 = por %p122, %p123
      %p125 = scmp.ne.s32.totalorder %s117, %s120
      %p126 = scmp.eq.s32.totalorder %s18, 0
      %p127 = por %p125, %p126
      %p128 = scmp.ne.s32.totalorder %s117, %s120
      %p129 = scmp.eq.s32.totalorder %s23, 1
      %p130 = por %p128, %p129
      %p131 = scmp.ne.s32.totalorder %s120, %s121
      %p132 = scmp.eq.s32.totalorder %s23, 0
      %p133 = por %p131, %p132
      %p134 = scmp.ne.s32.totalorder %s120, %s121
      %p135 = scmp.eq.s32.totalorder %s24, 1
      %p136 = por %p134, %p135
      %p138 = scmp.ne.s32.totalorder %s121, %s137
      %p139 = scmp.eq.s32.totalorder %s24, 0
      %p140 = por %p138, %p139
      %p141 = scmp.le.s32.totalorder 1, %s18
      %p142 = scmp.lt.s32.totalorder %s18, 3
      %p143 = pnand %p141, %p142
      %p144 = pneg %p143
      // Predicated region
      $region9: #{tpu_custom_call.1} parent=5 // pred_check
        _
      $region10: #{tpu_custom_call.1} parent=5 // pred_check_branch
        %146 = sbr.rel (%p143) target = $region12
      $region11: #{tpu_custom_call.1} parent=5 // pred_region
        %s147 = ssub.s32 %s18, 1
        // Predicated region
        $region13: #{tpu_custom_call.1} parent=11 // pred_check
          %p148 = pneg %p65
        $region14: #{tpu_custom_call.1} parent=11 // pred_check_branch
          %150 = sbr.rel (%p148) target = $region16
        $region15: #{tpu_custom_call.1} parent=11 // pred_region
          %s152 = ssub.s32 128, 128
          %153 = vsyncadd [#allocation6], %s152
          %s155 = sshll.u32 [#allocation5], 4
          %s156 = int_to_ptr.vmem [resolvable:$true] %s155
          %158 = dma.hbm_to_vmem [thread:$0]  %s1, 128, %s156, [#allocation6]
        $region16: #{tpu_custom_call.1} parent=11 // pred_fallthru
          _
        // Predicated region
        $region17: #{tpu_custom_call.1} parent=11 // pred_check
          %p159 = pneg %p86
        $region18: #{tpu_custom_call.1} parent=11 // pred_check_branch
          %161 = sbr.rel (%p159) target = $region20
        $region19: #{tpu_custom_call.1} parent=11 // pred_region
          %s163 = ssub.s32 128, 128
          %164 = vsyncadd [#allocation6], %s163
          %s166 = sshll.u32 [#allocation7], 4
          %s167 = int_to_ptr.vmem [resolvable:$true] %s166
          %169 = dma.hbm_to_vmem [thread:$0]  %s2, 128, %s167, [#allocation6]
        $region20: #{tpu_custom_call.1} parent=11 // pred_fallthru
          _
        // Predicated region
        $region21: #{tpu_custom_call.1} parent=11 // pred_check
          %p170 = pneg %p107
        $region22: #{tpu_custom_call.1} parent=11 // pred_check_branch
          %172 = sbr.rel (%p170) target = $region24
        $region23: #{tpu_custom_call.1} parent=11 // pred_region
          %s174 = ssub.s32 512, 512
          %175 = vsyncadd [#allocation9], %s174
          %s176 = sshll.u32 [#allocation8], 4
          %s177 = int_to_ptr.vmem [resolvable:$true] %s176
          %182 = dma.hbm_to_vmem [thread:$0]  %s3, 512, %s177, [#allocation9], 256, 256, 16
        $region24: #{tpu_custom_call.1} parent=11 // pred_fallthru
          _
      $region12: #{tpu_custom_call.1} parent=5 // pred_fallthru
        _
      %p183 = scmp.lt.s32.totalorder %s18, 2
      // Predicated region
      $region25: #{tpu_custom_call.1} parent=5 // pred_check
        %p184 = pneg %p183
      $region26: #{tpu_custom_call.1} parent=5 // pred_check_branch
        %186 = sbr.rel (%p184) target = $region28
      $region27: #{tpu_custom_call.1} parent=5 // pred_region
        // Predicated region
        $region29: #{tpu_custom_call.1} parent=27 // pred_check
          %p187 = pneg %p38
        $region30: #{tpu_custom_call.1} parent=27 // pred_check_branch
          %189 = sbr.rel (%p187) target = $region32
        $region31: #{tpu_custom_call.1} parent=27 // pred_region
          %s190 = sand.u32 %s28, 1
          %s191 = scalar_lea.sflag [#allocation3], %s190
          %s192 = sand.u32 %s28, 1
          %s193 = smul.addr %s192, 8
          %s194 = scalar_lea.vmem [#allocation2], %s193
          %s196 = ssub.s32 128, 128
          %197 = vsyncadd %s191, %s196
          %s198 = smul.addr %s18, 2
          %s199 = smul.addr %s198, 64
          %s200 = scalar_lea.hbm %s0, %s199
          %s202 = sshll.u32 %s194, 4
          %s203 = int_to_ptr.vmem [resolvable:$true] %s202
          %205 = dma.hbm_to_vmem [thread:$0]  %s200, 128, %s203, %s191
        $region32: #{tpu_custom_call.1} parent=27 // pred_fallthru
          _
      $region28: #{tpu_custom_call.1} parent=5 // pred_fallthru
        _
      %p206 = scmp.le.s32.totalorder 1, %s18
      %p207 = scmp.lt.s32.totalorder %s18, 3
      %p208 = pnand %p206, %p207
      %p209 = pneg %p208
      // Predicated region
      $region33: #{tpu_custom_call.1} parent=5 // pred_check
        _
      $region34: #{tpu_custom_call.1} parent=5 // pred_check_branch
        %211 = sbr.rel (%p208) target = $region36
      $region35: #{tpu_custom_call.1} parent=5 // pred_region
        %s212 = ssub.s32 %s18, 1
        %s213 = sand.u32 %s31, 1
        %s214 = scalar_lea.sflag [#allocation3], %s213
        %s215 = sand.u32 %s31, 1
        %s216 = smul.addr %s215, 8
        %s217 = scalar_lea.vmem [#allocation2], %s216
        // Predicated region
        $region37: #{tpu_custom_call.1} parent=35 // pred_check
          %p218 = pneg %p44
        $region38: #{tpu_custom_call.1} parent=35 // pred_check_branch
          %220 = sbr.rel (%p218) target = $region40
        $region39: #{tpu_custom_call.1} parent=35 // pred_region
          %221 = dma.done %s214, 128
        $region40: #{tpu_custom_call.1} parent=35 // pred_fallthru
          _
        // Predicated region
        $region41: #{tpu_custom_call.1} parent=35 // pred_check
          %p222 = pneg %p65
        $region42: #{tpu_custom_call.1} parent=35 // pred_check_branch
          %224 = sbr.rel (%p222) target = $region44
        $region43: #{tpu_custom_call.1} parent=35 // pred_region
          %225 = dma.done [#allocation6], 128
        $region44: #{tpu_custom_call.1} parent=35 // pred_fallthru
          _
        // Predicated region
        $region45: #{tpu_custom_call.1} parent=35 // pred_check
          %p226 = pneg %p86
        $region46: #{tpu_custom_call.1} parent=35 // pred_check_branch
          %228 = sbr.rel (%p226) target = $region48
        $region47: #{tpu_custom_call.1} parent=35 // pred_region
          %229 = dma.done [#allocation6], 128
        $region48: #{tpu_custom_call.1} parent=35 // pred_fallthru
          _
        // Predicated region
        $region49: #{tpu_custom_call.1} parent=35 // pred_check
          %p230 = pneg %p107
        $region50: #{tpu_custom_call.1} parent=35 // pred_check_branch
          %232 = sbr.rel (%p230) target = $region52
        $region51: #{tpu_custom_call.1} parent=35 // pred_region
          %233 = dma.done [#allocation9], 512
        $region52: #{tpu_custom_call.1} parent=35 // pred_fallthru
          _
        %s234 = sand.u32 %s31, 1
        %s235 = scalar_lea.sflag [#allocation3], %s234
        %s236 = sand.u32 %s31, 1
        %s237 = smul.addr %s236, 8
        %s238 = scalar_lea.vmem [#allocation2], %s237
        %p239 = pneg %p44
        %p240 = pneg %p41
        %p241 = pneg %p65
        %p242 = pneg %p62
        %p243 = pneg %p86
        %p244 = pneg %p83
        %p245 = pneg %p107
        %p246 = pneg %p104
        %p247 = pneg %p133
        %p248 = pneg %p130
        %s249 = sand.u32 %s120, 1
        %s250 = scalar_lea.sflag [#allocation4], %s249
        %s251 = sand.u32 %s120, 1
        %s252 = smul.addr %s251, 16
        %s253 = scalar_lea.vmem [#allocation10], %s252
        %v254 = vld [vmem:[%s217] sm:$0xff]
        %v255 = vld [vmem:[#allocation8] sm:$0xff]
        %v256 = vld [vmem:[#allocation8 + $0x8] sm:$0xff]
        %v257 = vld [vmem:[#allocation8 + $0x10] sm:$0x1]
        %v258 = vld [vmem:[#allocation8 + $0x18] sm:$0x1]
        %v260 = vcombine.high %v254, %v254
        %262 = vrot.lane.b32.xlu0 %v254, 17
        %v263 = vpop.permute.xlu0 %262
        %264 = vrot.lane.b32.xlu0 %v260, 17
        %v265 = vpop.permute.xlu0 %264
        %v266 = vlaneseq
        %v267 = vand.u32 %v266, 127
        %vm268 = vcmp.lt.s32.totalorder %v267, 17
        %v269 = vsel %vm268, %v263, %v265
        %v270 = vsel %vm268, %v265, %v263
        %v271 = vlaneseq
        %v272 = vshrl.u32 %v271, 7
        %v273 = vsub.s32 0, %v272
        %v274 = vrot.slane %v255, %v273
        %v275 = vlaneseq
        %v276 = vshrl.u32 %v275, 7
        %v277 = vsub.s32 0, %v276
        %v278 = vrot.slane %v256, %v277
        %v279 = vmul.f32 %v270, %v274
        %v280 = vmul.f32 %v269, %v278
        %281 = vrot.lane.b32.xlu0 %v254, 16
        %v282 = vpop.permute.xlu0 %281
        %283 = vrot.lane.b32.xlu0 %v260, 16
        %v284 = vpop.permute.xlu0 %283
        %vm285 = vcmp.lt.s32.totalorder %v267, 16
        %v286 = vsel %vm285, %v282, %v284
        %v287 = vsel %vm285, %v284, %v282
        %v288 = vlaneseq
        %v289 = vshrl.u32 %v288, 7
        %v290 = vsub.s32 1, %v289
        %v291 = vrot.slane %v255, %v290
        %v292 = vlaneseq
        %v293 = vshrl.u32 %v292, 7
        %v294 = vsub.s32 1, %v293
        %v295 = vrot.slane %v256, %v294
        %v296 = vmul.f32 %v287, %v291
        %v297 = vmul.f32 %v286, %v295
        %298 = vrot.lane.b32.xlu0 %v254, 15
        %v299 = vpop.permute.xlu0 %298
        %300 = vrot.lane.b32.xlu0 %v260, 15
        %v301 = vpop.permute.xlu0 %300
        %vm302 = vcmp.lt.s32.totalorder %v267, 15
        %v303 = vsel %vm302, %v299, %v301
        %v304 = vsel %vm302, %v301, %v299
        %v305 = vlaneseq
        %v306 = vshrl.u32 %v305, 7
        %v307 = vsub.s32 2, %v306
        %v308 = vrot.slane %v255, %v307
        %v309 = vlaneseq
        %v310 = vshrl.u32 %v309, 7
        %v311 = vsub.s32 2, %v310
        %v312 = vrot.slane %v256, %v311
        %v313 = vmul.f32 %v304, %v308
        %v314 = vmul.f32 %v303, %v312
        %315 = vrot.lane.b32.xlu0 %v254, 1
        %v316 = vpop.permute.xlu0 %315
        %317 = vrot.lane.b32.xlu0 %v260, 1
        %v318 = vpop.permute.xlu0 %317
        %vm319 = vcmp.lt.s32.totalorder %v267, 1
        %v320 = vsel %vm319, %v316, %v318
        %v321 = vsel %vm319, %v318, %v316
        %v322 = vlaneseq
        %v323 = vshrl.u32 %v322, 7
        %v324 = vsub.s32 3, %v323
        %v325 = vrot.slane %v255, %v324
        %v326 = vlaneseq
        %v327 = vshrl.u32 %v326, 7
        %v328 = vsub.s32 3, %v327
        %v329 = vrot.slane %v256, %v328
        %v330 = vmul.f32 %v321, %v325
        %v331 = vmul.f32 %v320, %v329
        %v332 = vlaneseq
        %v333 = vshrl.u32 %v332, 7
        %v334 = vsub.s32 4, %v333
        %v335 = vrot.slane %v255, %v334
        %v336 = vlaneseq
        %v337 = vshrl.u32 %v336, 7
        %v338 = vsub.s32 4, %v337
        %v339 = vrot.slane %v256, %v338
        %v342 = vcombine.low %v335, %v339
        %v344 = vmul.f32 %v254, %v342
        %345 = vrot.lane.b32.xlu0 %v254, 127
        %v346 = vpop.permute.xlu0 %345
        %347 = vrot.lane.b32.xlu0 %v260, 127
        %v348 = vpop.permute.xlu0 %347
        %vm349 = vcmp.lt.s32.totalorder %v267, 127
        %v350 = vsel %vm349, %v346, %v348
        %v351 = vsel %vm349, %v348, %v346
        %v352 = vlaneseq
        %v353 = vshrl.u32 %v352, 7
        %v354 = vsub.s32 5, %v353
        %v355 = vrot.slane %v255, %v354
        %v356 = vlaneseq
        %v357 = vshrl.u32 %v356, 7
        %v358 = vsub.s32 5, %v357
        %v359 = vrot.slane %v256, %v358
        %v360 = vmul.f32 %v350, %v355
        %v361 = vmul.f32 %v351, %v359
        %362 = vrot.lane.b32.xlu0 %v254, 113
        %v363 = vpop.permute.xlu0 %362
        %364 = vrot.lane.b32.xlu0 %v260, 113
        %v365 = vpop.permute.xlu0 %364
        %vm366 = vcmp.lt.s32.totalorder %v267, 113
        %v367 = vsel %vm366, %v363, %v365
        %v368 = vsel %vm366, %v365, %v363
        %v369 = vlaneseq
        %v370 = vshrl.u32 %v369, 7
        %v371 = vsub.s32 6, %v370
        %v372 = vrot.slane %v255, %v371
        %v373 = vlaneseq
        %v374 = vshrl.u32 %v373, 7
        %v375 = vsub.s32 6, %v374
        %v376 = vrot.slane %v256, %v375
        %v377 = vmul.f32 %v367, %v372
        %v378 = vmul.f32 %v368, %v376
        %379 = vrot.lane.b32.xlu0 %v254, 112
        %v380 = vpop.permute.xlu0 %379
        %381 = vrot.lane.b32.xlu0 %v260, 112
        %v382 = vpop.permute.xlu0 %381
        %vm383 = vcmp.lt.s32.totalorder %v267, 112
        %v384 = vsel %vm383, %v380, %v382
        %v385 = vsel %vm383, %v382, %v380
        %v386 = vlaneseq
        %v387 = vshrl.u32 %v386, 7
        %v388 = vsub.s32 7, %v387
        %v389 = vrot.slane %v255, %v388
        %v390 = vlaneseq
        %v391 = vshrl.u32 %v390, 7
        %v392 = vsub.s32 7, %v391
        %v393 = vrot.slane %v256, %v392
        %v394 = vmul.f32 %v384, %v389
        %v395 = vmul.f32 %v385, %v393
        %396 = vrot.lane.b32.xlu0 %v254, 111
        %v397 = vpop.permute.xlu0 %396
        %398 = vrot.lane.b32.xlu0 %v260, 111
        %v399 = vpop.permute.xlu0 %398
        %vm400 = vcmp.lt.s32.totalorder %v267, 111
        %v401 = vsel %vm400, %v397, %v399
        %v402 = vsel %vm400, %v399, %v397
        %v403 = vlaneseq
        %v404 = vshrl.u32 %v403, 7
        %v405 = vsub.s32 0, %v404
        %v406 = vrot.slane %v257, %v405
        %v407 = vlaneseq
        %v408 = vshrl.u32 %v407, 7
        %v409 = vsub.s32 0, %v408
        %v410 = vrot.slane %v258, %v409
        %v411 = vmul.f32 %v401, %v406
        %v412 = vmul.f32 %v402, %v410
        %v415 = vrot.slane %v296, 4
        %v416 = vrot.slane %v297, 4
        %v421 = vrot.slane %v330, 4
        %v422 = vrot.slane %v331, 4
        %v426 = vcombine.high %v344, %v344
        %v430 = vrot.slane %v360, 4
        %v431 = vrot.slane %v361, 4
        %v436 = vrot.slane %v394, 4
        %v437 = vrot.slane %v395, 4
        %vm440 = vcmask 1043456
        %v441 = vsel %vm440, %v279, %v415
        %v442 = vsel %vm440, %v280, %v416
        %v443 = vsel %vm440, %v313, %v421
        %v444 = vsel %vm440, %v314, %v422
        %v445 = vsel %vm440, %v344, %v430
        %v446 = vsel %vm440, %v426, %v431
        %v447 = vsel %vm440, %v377, %v436
        %v448 = vsel %vm440, %v378, %v437
        %v449 = vld [vmem:[#allocation5] sm:$0xff]
        %vm450 = vcmask 293888
        %v452 = vsel %vm450, %v449, 0
        %v455 = vsel %vm440, %v411, 0
        %v458 = vsel %vm440, %v412, 0
        %460 = vmatprep.subr.mxu0 %v442
        %461 = vmatpush1.msra.mxu0 %v441
        %462 = vmatprep.subr.mxu0 %v444
        %463 = vmatpush1.msra.mxu0 %v443
        %464 = vmatprep.subr.mxu0 %v446
        %465 = vmatpush1.msra.mxu0 %v445
        %466 = vmatprep.subr.mxu0 %v448
        %467 = vmatpush1.msra.mxu0 %v447
        %468 = vmatprep.subr.mxu0 %v458
        %469 = vmatpush1.msra.mxu0 %v455
        %470 = vmatprep.subr.mxu0 0.0
        %471 = vmatpush1.msra.mxu0 0.0
        %472 = vmatprep.subr.mxu0 0.0
        %473 = vmatpush1.msra.mxu0 0.0
        %474 = vmatprep.subr.mxu0 0.0
        %475 = vmatpush1.msra.mxu0 0.0
        %476 = vmatprep.subr.mxu0 0.0
        %477 = vmatpush1.msra.mxu0 0.0
        %478 = vmatprep.subr.mxu0 0.0
        %479 = vmatpush1.msra.mxu0 0.0
        %480 = vmatprep.subr.mxu0 0.0
        %481 = vmatpush1.msra.mxu0 0.0
        %482 = vmatprep.subr.mxu0 0.0
        %483 = vmatpush1.msra.mxu0 0.0
        %484 = vmatprep.subr.mxu0 0.0
        %485 = vmatpush1.msra.mxu0 0.0
        %486 = vmatprep.subr.mxu0 0.0
        %487 = vmatpush1.msra.mxu0 0.0
        %488 = vmatprep.subr.mxu0 0.0
        %489 = vmatpush1.msra.mxu0 0.0
        %490 = vmatprep.subr.mxu0 0.0
        %491 = vmatpush1.msra.mxu0 0.0
        %492 = vmatprep.subr.mxu0 0.0
        %493 = vmatpush1.msra.mxu0 0.0
        %494 = vmatprep.subr.mxu0 0.0
        %495 = vmatpush1.msra.mxu0 0.0
        %496 = vmatprep.subr.mxu0 0.0
        %497 = vmatpush1.msra.mxu0 0.0
        %498 = vmatprep.subr.mxu0 0.0
        %499 = vmatpush1.msra.mxu0 0.0
        %500 = vmatprep.subr.mxu0 0.0
        %501 = vmatpush1.msra.mxu0 0.0
        %502 = vmatprep.subr.mxu0 0.0
        %503 = vmatpush1.msra.mxu0 0.0
        %504 = vmatprep.subr.mxu0 0.0
        %505 = vmatpush1.msra.mxu0 0.0
        %506 = vmatprep.subr.mxu0 0.0
        %507 = vmatpush1.msra.mxu0 0.0
        %508 = vmatprep.subr.mxu0 0.0
        %509 = vmatpush1.msra.mxu0 0.0
        %510 = vmatprep.subr.mxu0 0.0
        %511 = vmatpush1.msra.mxu0 0.0
        %512 = vmatprep.subr.mxu0 0.0
        %513 = vmatpush1.msra.mxu0 0.0
        %514 = vmatprep.subr.mxu0 0.0
        %515 = vmatpush1.msra.mxu0 0.0
        %516 = vmatprep.subr.mxu0 0.0
        %517 = vmatpush1.msra.mxu0 0.0
        %518 = vmatprep.subr.mxu0 0.0
        %519 = vmatpush1.msra.mxu0 0.0
        %520 = vmatprep.subr.mxu0 0.0
        %521 = vmatpush1.msra.mxu0 0.0
        %522 = vmatprep.subr.mxu0 0.0
        %523 = vmatpush1.msra.mxu0 0.0
        %524 = vmatprep.mubr.f32.mxu0 0.0
        %525 = vmatmul.mubr.f32.gmra.mrb[0].mxu0 %v452
        %v526 = vpop.f32.mrb[0].mxu0
        %v527 = vadd.f32 0.0, %v526
        %v528 = vpop.f32.mrb[0].mxu0
        %v529 = vadd.f32 0.0, %v528
        %530 = vdwg.mxu0
        %v531 = vadd.f32 %v527, %v529
        %532 = vadd.xlane.f32.xlu0 %v531
        %v533 = vpop.xlane.xlu0 %532
        %v534 = vrcp.pop 256.0
        %v535 = vmul.f32 %v533, %v534
        %v536 = vsub.f32 %v527, %v535
        %v537 = vsub.f32 %v529, %v535
        %v538 = vmul.f32 %v536, %v536
        %v539 = vmul.f32 %v537, %v537
        %v540 = vadd.f32 %v538, %v539
        %541 = vadd.xlane.f32.xlu0 %v540
        %v542 = vpop.xlane.xlu0 %541
        %v543 = vmul.f32 %v542, %v534
        %v544 = vadd.f32 %v543, 1e-05
        %v545 = vrsqrt.pop %v544
        %v546 = vmul.f32 %v536, %v545
        %v547 = vmul.f32 %v537, %v545
        %vm548 = vcmp.ge.f32.partialorder %v546, 0.0
        %vm549 = vcmp.ge.f32.partialorder %v547, 0.0
        %v550 = vmul.f32 %v546, 0.1
        %v551 = vmul.f32 %v547, 0.1
        %v552 = vsel %vm548, %v546, %v550
        %v553 = vsel %vm549, %v547, %v551
        %v554 = vld [vmem:[#allocation7] sm:$0xff]
        %vm555 = vcmask 64512
        %v557 = vsel %vm555, %v554, 0
        %559 = vmatprep.subr.mxu0 %v553
        %560 = vmatpush1.msra.mxu0 %v552
        %561 = vmatprep.subr.mxu0 0.0
        %562 = vmatpush1.msra.mxu0 0.0
        %563 = vmatprep.subr.mxu0 0.0
        %564 = vmatpush1.msra.mxu0 0.0
        %565 = vmatprep.subr.mxu0 0.0
        %566 = vmatpush1.msra.mxu0 0.0
        %567 = vmatprep.subr.mxu0 0.0
        %568 = vmatpush1.msra.mxu0 0.0
        %569 = vmatprep.subr.mxu0 0.0
        %570 = vmatpush1.msra.mxu0 0.0
        %571 = vmatprep.subr.mxu0 0.0
        %572 = vmatpush1.msra.mxu0 0.0
        %573 = vmatprep.subr.mxu0 0.0
        %574 = vmatpush1.msra.mxu0 0.0
        %575 = vmatprep.subr.mxu0 0.0
        %576 = vmatpush1.msra.mxu0 0.0
        %577 = vmatprep.subr.mxu0 0.0
        %578 = vmatpush1.msra.mxu0 0.0
        %579 = vmatprep.subr.mxu0 0.0
        %580 = vmatpush1.msra.mxu0 0.0
        %581 = vmatprep.subr.mxu0 0.0
        %582 = vmatpush1.msra.mxu0 0.0
        %583 = vmatprep.subr.mxu0 0.0
        %584 = vmatpush1.msra.mxu0 0.0
        %585 = vmatprep.subr.mxu0 0.0
        %586 = vmatpush1.msra.mxu0 0.0
        %587 = vmatprep.subr.mxu0 0.0
        %588 = vmatpush1.msra.mxu0 0.0
        %589 = vmatprep.subr.mxu0 0.0
        %590 = vmatpush1.msra.mxu0 0.0
        %591 = vmatprep.subr.mxu0 0.0
        %592 = vmatpush1.msra.mxu0 0.0
        %593 = vmatprep.subr.mxu0 0.0
        %594 = vmatpush1.msra.mxu0 0.0
        %595 = vmatprep.subr.mxu0 0.0
        %596 = vmatpush1.msra.mxu0 0.0
        %597 = vmatprep.subr.mxu0 0.0
        %598 = vmatpush1.msra.mxu0 0.0
        %599 = vmatprep.subr.mxu0 0.0
        %600 = vmatpush1.msra.mxu0 0.0
        %601 = vmatprep.subr.mxu0 0.0
        %602 = vmatpush1.msra.mxu0 0.0
        %603 = vmatprep.subr.mxu0 0.0
        %604 = vmatpush1.msra.mxu0 0.0
        %605 = vmatprep.subr.mxu0 0.0
        %606 = vmatpush1.msra.mxu0 0.0
        %607 = vmatprep.subr.mxu0 0.0
        %608 = vmatpush1.msra.mxu0 0.0
        %609 = vmatprep.subr.mxu0 0.0
        %610 = vmatpush1.msra.mxu0 0.0
        %611 = vmatprep.subr.mxu0 0.0
        %612 = vmatpush1.msra.mxu0 0.0
        %613 = vmatprep.subr.mxu0 0.0
        %614 = vmatpush1.msra.mxu0 0.0
        %615 = vmatprep.subr.mxu0 0.0
        %616 = vmatpush1.msra.mxu0 0.0
        %617 = vmatprep.subr.mxu0 0.0
        %618 = vmatpush1.msra.mxu0 0.0
        %619 = vmatprep.subr.mxu0 0.0
        %620 = vmatpush1.msra.mxu0 0.0
        %621 = vmatprep.subr.mxu0 0.0
        %622 = vmatpush1.msra.mxu0 0.0
        %623 = vmatprep.mubr.f32.mxu0 0.0
        %624 = vmatmul.mubr.f32.gmra.mrb[0].mxu0 %v557
        %v625 = vpop.f32.mrb[0].mxu0
        %v626 = vadd.f32 0.0, %v625
        %v627 = vpop.f32.mrb[0].mxu0
        %v628 = vadd.f32 0.0, %v627
        %629 = vdwg.mxu0
        %630 = vst [vmem:[%s253] sm:$0xff] %v626
        %631 = vst [vmem:[%s253 + $0x8] sm:$0xff] %v628
        %s632 = sand.u32 %s120, 1
        %s633 = scalar_lea.sflag [#allocation4], %s632
        %s634 = sand.u32 %s120, 1
        %s635 = smul.addr %s634, 16
        %s636 = scalar_lea.vmem [#allocation10], %s635
        // Predicated region
        $region53: #{tpu_custom_call.1} parent=35 // pred_check
          %p637 = pneg %p130
        $region54: #{tpu_custom_call.1} parent=35 // pred_check_branch
          %639 = sbr.rel (%p637) target = $region56
        $region55: #{tpu_custom_call.1} parent=35 // pred_region
          %s641 = ssub.s32 256, 256
          %642 = vsyncadd %s633, %s641
          %s643 = smul.addr %s23, 2
          %s644 = smul.addr %s643, 128
          %s645 = scalar_lea.hbm %s4, %s644
          %s647 = sshll.u32 %s636, 4
          %s648 = int_to_ptr.vmem [resolvable:$true] %s647
          %650 = dma.vmem_to_hbm [thread:$0]  %s648, 256, %s645, %s633
        $region56: #{tpu_custom_call.1} parent=35 // pred_fallthru
          _
      $region36: #{tpu_custom_call.1} parent=5 // pred_fallthru
        _
      %p651 = scmp.le.s32.totalorder 2, %s18
      // Predicated region
      $region57: #{tpu_custom_call.1} parent=5 // pred_check
        %p652 = pneg %p651
      $region58: #{tpu_custom_call.1} parent=5 // pred_check_branch
        %654 = sbr.rel (%p652) target = $region60
      $region59: #{tpu_custom_call.1} parent=5 // pred_region
        %s655 = ssub.s32 %s18, 2
        // Predicated region
        $region61: #{tpu_custom_call.1} parent=59 // pred_check
          %p656 = pneg %p136
        $region62: #{tpu_custom_call.1} parent=59 // pred_check_branch
          %658 = sbr.rel (%p656) target = $region64
        $region63: #{tpu_custom_call.1} parent=59 // pred_region
          %s659 = sand.u32 %s121, 1
          %s660 = scalar_lea.sflag [#allocation4], %s659
          %s661 = sand.u32 %s121, 1
          %s662 = smul.addr %s661, 16
          %s663 = scalar_lea.vmem [#allocation10], %s662
          %664 = dma.done %s660, 256
        $region64: #{tpu_custom_call.1} parent=59 // pred_fallthru
          _
      $region60: #{tpu_custom_call.1} parent=5 // pred_fallthru
        _
    $region6: #{tpu_custom_call.1} parent=1 // loop_footer
      %s22 = sadd.s32 1, %s18
    $region7: #{tpu_custom_call.1} parent=1 // loop_footer_branch
      %17 = sbr.rel target = $region3
    $region8: #{tpu_custom_call.1} parent=1 // loop_exit
      _
    %665 = vsyncpa [#allocation3], 1
    %s666 = scalar_lea.sflag [#allocation3], 1
    %667 = vsyncpa %s666, 1
    %668 = vsyncpa [#allocation6], 1
    %669 = vsyncpa [#allocation9], 1
    %670 = vsyncpa [#allocation4], 1
    %s671 = scalar_lea.sflag [#allocation4], 1
    %672 = vsyncpa %s671, 1

</llo_original>
